<compile_context>
chip_gen: v7x
topology: tpu7x:2x2x1
jax: 0.10.0
libtpu: 0.0.40
codegen_flags: <defaults>
</compile_context>

<pallas_src>
import functools
import math

import jax
import jax.numpy as jnp
from jax import lax
from jax.experimental import pallas as pl
from jax.experimental.pallas import tpu as pltpu


# ----------------------------------------------------------------------------
# Pooling-matrix construction (host side, cached per geometry + dtype)
# ----------------------------------------------------------------------------
def _adaptive_pool_matrix_1d(in_size: int, out_size: int):
    """Rows of the (out_size, in_size) averaging matrix used by AdaptiveAvgPool."""
    rows = []
    for i in range(out_size):
        start = (i * in_size) // out_size
        end = -(-((i + 1) * in_size) // out_size)  # ceil
        w = [0.0] * in_size
        n = end - start
        for k in range(start, end):
            w[k] = 1.0 / n
        rows.append(w)
    return jnp.asarray(rows, dtype=jnp.float32)


@functools.lru_cache(maxsize=32)
def build_pool_matrix(h: int, w: int, oh: int, ow: int, dtype_name: str) -> jnp.ndarray:
    """(OH*OW, h*w) pooling matrix: adaptive avg pool as a token-mixing matmul.

    Built in f32, then cast to `dtype_name` (matching the activation dtype keeps
    the MXU on its fast bf16 path; 1/n weights round by <=0.4% in bf16).
    Cached so the host-side einsum + upload run once per geometry/dtype.
    """
    pr = _adaptive_pool_matrix_1d(h, oh)   # (OH, h)
    pc = _adaptive_pool_matrix_1d(w, ow)   # (OW, w)
    # W[(i*OW+j), (r*w+s)] = pr[i, r] * pc[j, s]
    W = jnp.einsum("ir,js->ijrs", pr, pc).reshape(oh * ow, h * w)
    return W.astype(jnp.dtype(dtype_name))


# ----------------------------------------------------------------------------
# Kernel
# ----------------------------------------------------------------------------
def _token_down_kernel(w_ref, x_ref, o_ref):
    # w_ref: (M, N)          pooling matrix, resident in VMEM (constant index_map)
    # x_ref: (BT, N, TILE_C) batch-block of tokens (C last -> lane-dense)
    # o_ref: (BT, M, TILE_C) pooled tokens
    bt = x_ref.shape[0]
    w = w_ref[...]

    def body(b, carry):
        # Plain 2D MXU matmul per batch: (M, N) @ (N, TILE_C) -> (M, TILE_C).
        # No (BT, M, N) broadcast of W; f32 accumulate, cast on store.
        o_ref[b] = jnp.dot(
            w, x_ref[b], preferred_element_type=jnp.float32
        ).astype(o_ref.dtype)
        return carry

    # Short, fixed trip count -> fully unrolled for LLO scheduler visibility.
    lax.fori_loop(0, bt, body, 0, unroll=True)


# ----------------------------------------------------------------------------
# Tile selection (generation-aware)
# ----------------------------------------------------------------------------
def _vmem_bytes(bt, tile_c, n, m, x_itemsize, w_itemsize):
    """Per-step VMEM estimate: double-buffered x/out tiles, W block (counted 2x
    to be safe), and the per-batch f32 dot result."""
    w_buf = 2 * m * n * w_itemsize
    x_buf = 2 * bt * n * tile_c * x_itemsize
    o_buf = 2 * bt * m * tile_c * x_itemsize
    f32_tmp = 2 * m * tile_c * 4
    return w_buf + x_buf + o_buf + f32_tmp


def _choose_tiles(b, n, m, c, x_itemsize, w_itemsize):
    """Returns (bt, tile_c, vmem_limit_bytes)."""
    # Generation-aware budget: ~1/4 of physical VMEM (v5e/v6e: 32 MiB of 128,
    # v7x: 16 MiB of 64), leaving headroom for compiler temporaries.
    try:
        vmem_cap = int(pltpu.get_tpu_info().vmem_capacity_bytes)
    except Exception:
        vmem_cap = 64 * 1024 * 1024  # conservative (v7x-sized) fallback
    budget = max(16 * 1024 * 1024, vmem_cap // 4)

    # Channel (lane) tile: prefer the FULL C so each batch's read/write is one
    # long contiguous DMA with unmasked lane-dense stores; BT is the VMEM knob.
    tile_c = c
    if (_vmem_bytes(1, tile_c, n, m, x_itemsize, w_itemsize) > budget
            and c % 128 == 0):
        # Single-batch full-C tile too big: largest 128-multiple tile that
        # fits the budget and divides C evenly (no mostly-padded tail block).
        k = c // 128
        chosen = 128
        for d in range(k, 0, -1):
            if k % d == 0:
                cand = d * 128
                if _vmem_bytes(1, cand, n, m, x_itemsize, w_itemsize) <= budget:
                    chosen = cand
                    break
        tile_c = chosen
    # NOTE: if C is not a multiple of 128 we keep tile_c == C (stores are
    # lane-masked) and raise vmem_limit_bytes to the computed need below.

    # Batch tile: as many batches as fit in the budget.
    per_batch = 2 * (n + m) * tile_c * x_itemsize
    fixed = 2 * m * n * w_itemsize + 2 * m * tile_c * 4
    bt = max(1, min(b, (budget - fixed) // max(1, per_batch)))

    # Megacore: avoid a single-step grid so v7x's second TensorCore gets work.
    # One extra ~0.35 us grid step is noise on v5e/v6e.
    if bt >= b and pl.cdiv(c, tile_c) == 1:
        if b > 1:
            bt = pl.cdiv(b, 2)
        elif c % 256 == 0:
            tile_c = c // 2

    need = _vmem_bytes(bt, tile_c, n, m, x_itemsize, w_itemsize)
    vmem_limit = max(need * 5 // 4, 32 * 1024 * 1024)      # ~25% headroom
    vmem_limit = max(min(vmem_limit, vmem_cap), need)      # stay within chip
    return bt, tile_c, int(vmem_limit)


# ----------------------------------------------------------------------------
# Public wrapper
# ----------------------------------------------------------------------------
def token_down_layer(x: jnp.ndarray, out_shape: tuple[int, int]) -> jnp.ndarray:
    """x: (B, N, C) with N a perfect square. Returns (B, OH*OW, C)."""
    b, num_tokens, c = x.shape
    h = math.isqrt(num_tokens)
    assert h * h == num_tokens, f"In downsampling {h}^2 != {num_tokens}"
    oh, ow = out_shape
    m = oh * ow

    # Match W dtype to the activations (bf16 W for bf16 x keeps the MXU on its
    # fast path); f32 activations keep exact f32 pooling weights.
    w_dtype = jnp.float32 if jnp.dtype(x.dtype) == jnp.float32 else x.dtype
    W = build_pool_matrix(h, h, oh, ow, jnp.dtype(w_dtype).name)  # (M, N)

    x_itemsize = jnp.dtype(x.dtype).itemsize
    w_itemsize = jnp.dtype(w_dtype).itemsize
    bt, tile_c, vmem_limit = _choose_tiles(
        b, num_tokens, m, c, x_itemsize, w_itemsize)

    grid = (pl.cdiv(b, bt), pl.cdiv(c, tile_c))

    cost = pl.CostEstimate(
        flops=2 * b * m * num_tokens * c,
        transcendentals=0,
        bytes_accessed=(b * num_tokens * c + b * m * c) * x_itemsize
        + m * num_tokens * w_itemsize,
    )

    # TODO(synk): optional v7x sweep of pipeline_mode=pl.Buffered(3) on the x
    # input; keep only if it measures.
    return pl.pallas_call(
        _token_down_kernel,
        out_shape=jax.ShapeDtypeStruct((b, m, c), x.dtype),
        grid_spec=pltpu.PrefetchScalarGridSpec(
            num_scalar_prefetch=0,
            grid=grid,
            in_specs=[
                # W: constant index_map -> fetched once, stays resident.
                pl.BlockSpec((m, num_tokens), lambda i, j: (0, 0)),
                # x: BT batches x full token axis x a channel tile (C last).
                pl.BlockSpec((bt, num_tokens, tile_c), lambda i, j: (i, 0, j)),
            ],
            out_specs=pl.BlockSpec((bt, m, tile_c), lambda i, j: (i, 0, j)),
        ),
        compiler_params=pltpu.CompilerParams(
            # Both grid axes are independent -> shardable across v7x's 2 TCs.
            dimension_semantics=("parallel", "parallel"),
            vmem_limit_bytes=vmem_limit,
        ),
        cost_estimate=cost,
    )(W, x)


# ----------------------------------------------------------------------------
# Pure-JAX reference (PyTorch AdaptiveAvgPool2d semantics) + smoke test
# ----------------------------------------------------------------------------
def _reference_token_down(x: jnp.ndarray, out_shape: tuple[int, int]) -> jnp.ndarray:
    b, num_tokens, c = x.shape
    h = math.isqrt(num_tokens)
    oh, ow = out_shape
    xi = jnp.transpose(x, (0, 2, 1)).reshape(b, c, h, h)  # NCHW
    out = jnp.zeros((b, c, oh, ow), dtype=jnp.float32)
    for i in range(oh):
        rs = (i * h) // oh
        re = -(-((i + 1) * h) // oh)
        for j in range(ow):
            cs = (j * h) // ow
            ce = -(-((j + 1) * h) // ow)
            out = out.at[:, :, i, j].set(
                jnp.mean(xi[:, :, rs:re, cs:ce].astype(jnp.float32), axis=(2, 3))
            )
    return jnp.transpose(out.reshape(b, c, oh * ow), (0, 2, 1)).astype(x.dtype)


if __name__ == "__main__":
    key = jax.random.PRNGKey(0)
    B, H, C = 2, 6, 32            # num_tokens = 36
    OUT_SHAPE = (4, 4)            # adaptive pool target -> 16 tokens out
    N = H * H

    # float32 path (exact pooling weights)
    x = jax.random.normal(key, (B, N, C), dtype=jnp.float32)
    y = jax.block_until_ready(token_down_layer(x, OUT_SHAPE))
    y_ref = _reference_token_down(x, OUT_SHAPE)
    assert y.shape == (B, OUT_SHAPE[0] * OUT_SHAPE[1], C), y.shape
    assert jnp.allclose(y, y_ref, atol=1e-5, rtol=1e-5), "f32 mismatch vs reference"

    # bfloat16 path (bf16 W + bf16 x, f32 accumulate)
    xb = x.astype(jnp.bfloat16)
    yb = jax.block_until_ready(token_down_layer(xb, OUT_SHAPE))
    yb_ref = _reference_token_down(xb, OUT_SHAPE)
    assert yb.shape == (B, OUT_SHAPE[0] * OUT_SHAPE[1], C), yb.shape
    assert jnp.allclose(yb.astype(jnp.float32), yb_ref.astype(jnp.float32),
                        atol=6e-2, rtol=6e-2), "bf16 mismatch vs reference"

    print("KERNEL_OK")
</pallas_src>

<mosaic_0001>
module attributes {stable_mosaic.version = 11 : i64} {
  func.func @_token_down_kernel(%arg0: i32, %arg1: i32, %arg2: memref<16x36xf32, #tpu.memory_space<vmem>>, %arg3: memref<1x36x32xf32, #tpu.memory_space<vmem>>, %arg4: memref<1x16x32xf32, #tpu.memory_space<vmem>>) attributes {dimension_semantics = [#tpu.dimension_semantics<parallel>, #tpu.dimension_semantics<parallel>], iteration_bounds = array<i64: 2, 1>, scalar_prefetch = 0 : i64, scratch_operands = 0 : i64, tpu.core_type = #tpu.core_type<tc>, window_params = [{pipeline_mode = #tpu.pipeline_mode<synchronous>, transform_indices = @transform_0, window_bounds = array<i64: 16, 36>}, {transform_indices = @transform_1, window_bounds = array<i64: 1, 36, 32>}, {transform_indices = @transform_2, window_bounds = array<i64: 1, 16, 32>}]} {
    %c0 = arith.constant 0 : index
    %c0_0 = arith.constant 0 : index
    %0 = vector.load %arg2[%c0, %c0_0] : memref<16x36xf32, #tpu.memory_space<vmem>>, vector<16x36xf32>
    %c0_i32 = arith.constant 0 : i32
    %1 = arith.index_cast %c0_i32 : i32 to index
    %c0_1 = arith.constant 0 : index
    %c0_2 = arith.constant 0 : index
    %2 = vector.load %arg3[%1, %c0_1, %c0_2] : memref<1x36x32xf32, #tpu.memory_space<vmem>>, vector<1x36x32xf32>
    %3 = vector.shape_cast %2 : vector<1x36x32xf32> to vector<36x32xf32>
    %cst = arith.constant dense<0.000000e+00> : vector<16x32xf32>
    %4 = tpu.matmul %0, %3, %cst {dimension_numbers = #tpu.dot_dimension_numbers<[1], [0], [0], [1], [0, 0, 1, 1], [], []>} : vector<16x36xf32>, vector<36x32xf32>, vector<16x32xf32> -> vector<16x32xf32>
    %5 = arith.index_cast %c0_i32 : i32 to index
    %c0_3 = arith.constant 0 : index
    %c0_4 = arith.constant 0 : index
    %6 = vector.load %arg4[%5, %c0_3, %c0_4] : memref<1x16x32xf32, #tpu.memory_space<vmem>>, vector<1x16x32xf32>
    %7 = vector.shape_cast %6 : vector<1x16x32xf32> to vector<16x32xf32>
    %8 = vector.shape_cast %4 : vector<16x32xf32> to vector<1x16x32xf32>
    tpu.vector_store %arg4[%5, %c0_3, %c0_4], %8 {strides = array<i32>} : memref<1x16x32xf32, #tpu.memory_space<vmem>>, vector<1x16x32xf32>,
    %c1_i32 = arith.constant 1 : i32
    return
  }
  func.func @transform_0(%arg0: i32, %arg1: i32) -> (i32, i32) {
    %c0_i32 = arith.constant 0 : i32
    %c0_i32_0 = arith.constant 0 : i32
    %c0_i32_1 = arith.constant 0 : i32
    return %c0_i32, %c0_i32_0 : i32, i32
  }
  func.func @transform_1(%arg0: i32, %arg1: i32) -> (i32, i32, i32) {
    %c0_i32 = arith.constant 0 : i32
    %c0_i32_0 = arith.constant 0 : i32
    return %arg0, %c0_i32, %arg1 : i32, i32, i32
  }
  func.func @transform_2(%arg0: i32, %arg1: i32) -> (i32, i32, i32) {
    %c0_i32 = arith.constant 0 : i32
    %c0_i32_0 = arith.constant 0 : i32
    return %arg0, %c0_i32, %arg1 : i32, i32, i32
  }
}

</mosaic_0001>

<llo_original>
// kernel: tpu_custom_call.1
$region0: #{tpu_custom_call.1}
  #allocation0 [shape = 'u32[]', space=smem, size = 0x4, offset = 0x4, fixed_abs, tag = 'smem constant byte address 0x4 - core index']
  #allocation1 [shape = 'u32[144,128]{1,0:T(1,128)}', space=vmem, size = 0x12000, scoped, tag = 'internal scratch']
  %s0 = inlined_call_operand.vmem [shape: f32[16,36], index: 0, kind: input, shape index: {}]
  %s1 = inlined_call_operand.vmem [shape: f32[2,36,32], index: 1, kind: input, shape index: {}]
  %s2 = inlined_call_operand.hbm [shape: f32[2,16,32], index: 2, kind: output, shape index: {}]
  %s3 = sld [smem:[#allocation0]]
  $region41: #{tpu_custom_call.1} parent=0
    _
  %s5 = ssub.s32 1, %s3
  %s6 = scalar_select 0, %s5, %s3
  $region1: #{tpu_custom_call.1} parent=0
    #allocation2 [shape = 'u8[16384]{0}', space=vmem, size = 0x4000, scoped, tag = 'output window, operand 0']
    #allocation3 [shape = 's32[2]{0}', space=sflag, size = 0x8, scoped, tag = 'scoped memory for tpu_custom_call.1']
    %7 = vsyncpa [#allocation3], 0
    %s8 = scalar_lea.sflag [#allocation3], 1
    %9 = vsyncpa %s8, 0
    loop: start=0, step=1, limit=4
    $region2: #{tpu_custom_call.1} parent=1 // loop_pre_header
      _
    $region3: #{tpu_custom_call.1} parent=1 // loop_header
      %s11 = sphi 0, %s15
      %p12 = scmp.ge.s32.totalorder %s11, 4
      %s18 = sphi 0, %s30
      %s19 = sphi 0, %s26
      %s20 = sphi 0, %s18
      %s21 = sphi 0, %s19
      %s22 = sphi 0, %s20
      %s23 = sphi 0, %s21
      %s31 = sphi 0, %s31
      %s33 = sphi 0, %s31
      %s34 = sphi 0, %s33
      %s48 = sphi 0, %s34
      %s56 = sphi 0, %s58
      %s59 = sphi 0, %s56
      %s60 = sphi 0, %s59
      %s76 = sphi 0, %s60
      %s84 = sphi 0, %s86
      %s87 = sphi 0, %s84
      %s88 = sphi 0, %s87
      %s104 = sphi 0, %s88
    $region4: #{tpu_custom_call.1} parent=1 // loop_header_branch
      %14 = sbr.rel (%p12) target = $region8
    $region5: #{tpu_custom_call.1} parent=1 // loop_body
      %s16 = ssub.s32 %s11, 1
      %s17 = ssub.s32 %s11, 2
      %s24 = sadd.s32 1, %s19
      %p25 = scmp.ge.s32.totalorder %s24, 1
      %s26 = scalar_select %p25, 0, %s24
      %s27 = sadd.s32 1, %s18
      %s28 = scalar_select %p25, %s27, %s18
      %p29 = scmp.ge.s32.totalorder %s28, 2
      %s30 = scalar_select %p29, 0, %s28
      %s32 = sadd.s32 %s31, 1
      %p35 = scmp.eq.s32.totalorder %s11, 1
      %p36 = scmp.ne.s32.totalorder %s31, %s33
      %p37 = scmp.eq.s32.totalorder %s11, 0
      %p38 = por %p36, %p37
      %p39 = scmp.ne.s32.totalorder %s31, %s33
      %p40 = scmp.eq.s32.totalorder %s16, 1
      %p41 = por %p39, %p40
      %p42 = scmp.ne.s32.totalorder %s33, %s34
      %p43 = scmp.eq.s32.totalorder %s16, 0
      %p44 = por %p42, %p43
      %p45 = scmp.ne.s32.totalorder %s33, %s34
      %p46 = scmp.eq.s32.totalorder %s17, 1
      %p47 = por %p45, %p46
      %p49 = scmp.ne.s32.totalorder %s34, %s48
      %p50 = scmp.eq.s32.totalorder %s17, 0
      %p51 = por %p49, %p50
      %s52 = ssub.s32 %s18, %s30
      %s53 = ssub.s32 %s19, %s26
      %s54 = sor.u32 %s52, %s53
      %p55 = scmp.eq.s32.totalorder %s54, 0
      %s57 = sadd.s32 %s56, 1
      %s58 = scalar_select %p55, %s56, %s57
      %p61 = pneg %p55
      %p62 = scmp.eq.s32.totalorder %s11, 1
      %p63 = por %p61, %p62
      %p64 = scmp.ne.s32.totalorder %s56, %s59
      %p65 = scmp.eq.s32.totalorder %s11, 0
      %p66 = por %p64, %p65
      %p67 = scmp.ne.s32.totalorder %s56, %s59
      %p68 = scmp.eq.s32.totalorder %s16, 1
      %p69 = por %p67, %p68
      %p70 = scmp.ne.s32.totalorder %s59, %s60
      %p71 = scmp.eq.s32.totalorder %s16, 0
      %p72 = por %p70, %p71
      %p73 = scmp.ne.s32.totalorder %s59, %s60
      %p74 = scmp.eq.s32.totalorder %s17, 1
      %p75 = por %p73, %p74
      %p77 = scmp.ne.s32.totalorder %s60, %s76
      %p78 = scmp.eq.s32.totalorder %s17, 0
      %p79 = por %p77, %p78
      %s80 = ssub.s32 %s18, %s30
      %s81 = ssub.s32 %s19, %s26
      %s82 = sor.u32 %s80, %s81
      %p83 = scmp.eq.s32.totalorder %s82, 0
      %s85 = sadd.s32 %s84, 1
      %s86 = scalar_select %p83, %s84, %s85
      %p89 = pneg %p83
      %p90 = scmp.eq.s32.totalorder %s11, 1
      %p91 = por %p89, %p90
      %p92 = scmp.ne.s32.totalorder %s84, %s87
      %p93 = scmp.eq.s32.totalorder %s11, 0
      %p94 = por %p92, %p93
      %p95 = scmp.ne.s32.totalorder %s84, %s87
      %p96 = scmp.eq.s32.totalorder %s16, 1
      %p97 = por %p95, %p96
      %p98 = scmp.ne.s32.totalorder %s87, %s88
      %p99 = scmp.eq.s32.totalorder %s16, 0
      %p100 = por %p98, %p99
      %p101 = scmp.ne.s32.totalorder %s87, %s88
      %p102 = scmp.eq.s32.totalorder %s17, 1
      %p103 = por %p101, %p102
      %p105 = scmp.ne.s32.totalorder %s88, %s104
      %p106 = scmp.eq.s32.totalorder %s17, 0
      %p107 = por %p105, %p106
      %p108 = scmp.le.s32.totalorder 1, %s11
      %p109 = scmp.lt.s32.totalorder %s11, 3
      %p110 = pnand %p108, %p109
      %p111 = pneg %p110
      // Predicated region
      $region9: #{tpu_custom_call.1} parent=5 // pred_check
        _
      $region10: #{tpu_custom_call.1} parent=5 // pred_check_branch
        %113 = sbr.rel (%p110) target = $region12
      $region11: #{tpu_custom_call.1} parent=5 // pred_region
        %s114 = ssub.s32 %s11, 1
        // Predicated region
        $region13: #{tpu_custom_call.1} parent=11 // pred_check
          %p115 = pneg %p44
        $region14: #{tpu_custom_call.1} parent=11 // pred_check_branch
          %117 = sbr.rel (%p115) target = $region16
        $region15: #{tpu_custom_call.1} parent=11 // pred_region
          _
        $region16: #{tpu_custom_call.1} parent=11 // pred_fallthru
          _
      $region12: #{tpu_custom_call.1} parent=5 // pred_fallthru
        _
      %p118 = scmp.lt.s32.totalorder %s11, 2
      // Predicated region
      $region17: #{tpu_custom_call.1} parent=5 // pred_check
        %p119 = pneg %p118
      $region18: #{tpu_custom_call.1} parent=5 // pred_check_branch
        %121 = sbr.rel (%p119) target = $region20
      $region19: #{tpu_custom_call.1} parent=5 // pred_region
        // Predicated region
        $region21: #{tpu_custom_call.1} parent=19 // pred_check
          %p122 = pneg %p66
        $region22: #{tpu_custom_call.1} parent=19 // pred_check_branch
          %124 = sbr.rel (%p122) target = $region24
        $region23: #{tpu_custom_call.1} parent=19 // pred_region
          %p125 = scmp.lt.s32.totalorder %s18, 1
          %s126 = scalar_select %p125, %s18, 1
          %p127 = scmp.lt.s32.totalorder %s19, 0
          %s128 = scalar_select %p127, %s19, 0
          %s129 = smul.addr %s126, 5
          %s130 = sadd.s32 %s128, %s129
          %s131 = smul.addr %s130, 8
          %s132 = scalar_lea.vmem %s1, %s131
        $region24: #{tpu_custom_call.1} parent=19 // pred_fallthru
          _
      $region20: #{tpu_custom_call.1} parent=5 // pred_fallthru
        _
      %p133 = scmp.le.s32.totalorder 1, %s11
      %p134 = scmp.lt.s32.totalorder %s11, 3
      %p135 = pnand %p133, %p134
      %p136 = pneg %p135
      // Predicated region
      $region25: #{tpu_custom_call.1} parent=5 // pred_check
        _
      $region26: #{tpu_custom_call.1} parent=5 // pred_check_branch
        %138 = sbr.rel (%p135) target = $region28
      $region27: #{tpu_custom_call.1} parent=5 // pred_region
        %s139 = ssub.s32 %s11, 1
        %p140 = pneg %p44
        %p141 = pneg %p41
        %p142 = scmp.lt.s32.totalorder %s20, 1
        %s143 = scalar_select %p142, %s20, 1
        %p144 = scmp.lt.s32.totalorder %s21, 0
        %s145 = scalar_select %p144, %s21, 0
        %s146 = smul.addr %s143, 5
        %s147 = sadd.s32 %s145, %s146
        %s148 = smul.addr %s147, 8
        %s149 = scalar_lea.vmem %s1, %s148
        %p150 = pneg %p72
        %p151 = pneg %p69
        %p152 = pneg %p100
        %p153 = pneg %p97
        %s154 = sand.u32 %s87, 1
        %s155 = scalar_lea.sflag [#allocation3], %s154
        %s156 = sand.u32 %s87, 1
        %s157 = smul.addr %s156, 16
        %s158 = scalar_lea.vmem [#allocation2], %s157
        %p159 = scmp.lt.s32.totalorder %s20, 1
        %s160 = scalar_select %p159, %s20, 1
        %p161 = scmp.lt.s32.totalorder %s21, 0
        %s162 = scalar_select %p161, %s21, 0
        %s163 = smul.addr %s160, 5
        %s164 = sadd.s32 %s162, %s163
        %s165 = smul.addr %s164, 8
        %s166 = scalar_lea.vmem %s1, %s165
        %v167 = vld [vmem:[%s0] sm:$0xff]
        %v168 = vld [vmem:[%s0 + $0x8] sm:$0xff]
        %v169 = vld [vmem:[%s166] sm:$0xff]
        %v170 = vld [vmem:[%s166 + $0x8] sm:$0xff]
        %v171 = vld [vmem:[%s166 + $0x10] sm:$0xff]
        %v172 = vld [vmem:[%s166 + $0x18] sm:$0xff]
        %v173 = vld [vmem:[%s166 + $0x20] sm:$0xf]
        %vm174 = vcmask 293888
        %v176 = vsel %vm174, %v167, 0
        %v179 = vsel %vm174, %v168, 0
        %vm181 = vcmask 1043456
        %v183 = vsel %vm181, %v173, 0
        %185 = vmatprep.subr.mxu0 0.0
        %186 = vmatpush1.msra.mxu0 %v169
        %187 = vmatprep.subr.mxu0 0.0
        %188 = vmatpush1.msra.mxu0 %v170
        %189 = vmatprep.subr.mxu0 0.0
        %190 = vmatpush1.msra.mxu0 %v171
        %191 = vmatprep.subr.mxu0 0.0
        %192 = vmatpush1.msra.mxu0 %v172
        %193 = vmatprep.subr.mxu0 0.0
        %194 = vmatpush1.msra.mxu0 %v183
        %195 = vmatprep.subr.mxu0 0.0
        %196 = vmatpush1.msra.mxu0 0.0
        %197 = vmatprep.subr.mxu0 0.0
        %198 = vmatpush1.msra.mxu0 0.0
        %199 = vmatprep.subr.mxu0 0.0
        %200 = vmatpush1.msra.mxu0 0.0
        %201 = vmatprep.subr.mxu0 0.0
        %202 = vmatpush1.msra.mxu0 0.0
        %203 = vmatprep.subr.mxu0 0.0
        %204 = vmatpush1.msra.mxu0 0.0
        %205 = vmatprep.subr.mxu0 0.0
        %206 = vmatpush1.msra.mxu0 0.0
        %207 = vmatprep.subr.mxu0 0.0
        %208 = vmatpush1.msra.mxu0 0.0
        %209 = vmatprep.subr.mxu0 0.0
        %210 = vmatpush1.msra.mxu0 0.0
        %211 = vmatprep.subr.mxu0 0.0
        %212 = vmatpush1.msra.mxu0 0.0
        %213 = vmatprep.subr.mxu0 0.0
        %214 = vmatpush1.msra.mxu0 0.0
        %215 = vmatprep.subr.mxu0 0.0
        %216 = vmatpush1.msra.mxu0 0.0
        %217 = vmatprep.subr.mxu0 0.0
        %218 = vmatpush1.msra.mxu0 0.0
        %219 = vmatprep.subr.mxu0 0.0
        %220 = vmatpush1.msra.mxu0 0.0
        %221 = vmatprep.subr.mxu0 0.0
        %222 = vmatpush1.msra.mxu0 0.0
        %223 = vmatprep.subr.mxu0 0.0
        %224 = vmatpush1.msra.mxu0 0.0
        %225 = vmatprep.subr.mxu0 0.0
        %226 = vmatpush1.msra.mxu0 0.0
        %227 = vmatprep.subr.mxu0 0.0
        %228 = vmatpush1.msra.mxu0 0.0
        %229 = vmatprep.subr.mxu0 0.0
        %230 = vmatpush1.msra.mxu0 0.0
        %231 = vmatprep.subr.mxu0 0.0
        %232 = vmatpush1.msra.mxu0 0.0
        %233 = vmatprep.subr.mxu0 0.0
        %234 = vmatpush1.msra.mxu0 0.0
        %235 = vmatprep.subr.mxu0 0.0
        %236 = vmatpush1.msra.mxu0 0.0
        %237 = vmatprep.subr.mxu0 0.0
        %238 = vmatpush1.msra.mxu0 0.0
        %239 = vmatprep.subr.mxu0 0.0
        %240 = vmatpush1.msra.mxu0 0.0
        %241 = vmatprep.subr.mxu0 0.0
        %242 = vmatpush1.msra.mxu0 0.0
        %243 = vmatprep.subr.mxu0 0.0
        %244 = vmatpush1.msra.mxu0 0.0
        %245 = vmatprep.subr.mxu0 0.0
        %246 = vmatpush1.msra.mxu0 0.0
        %247 = vmatprep.subr.mxu0 0.0
        %248 = vmatpush1.msra.mxu0 0.0
        %249 = vmatprep.mubr.f32.mxu0 0.0
        %250 = vmatmul.mubr.f32.gmra.mrb[0].mxu0 %v176
        %v251 = vpop.f32.mrb[0].mxu0
        %v252 = vadd.f32 0.0, %v251
        %v253 = vpop.f32.mrb[0].mxu0
        %254 = vmatprep.mubr.f32.mxu0 0.0
        %255 = vmatmul.mubr.f32.gmra.mrb[0].mxu0 %v179
        %v256 = vpop.f32.mrb[0].mxu0
        %v257 = vadd.f32 0.0, %v256
        %v258 = vpop.f32.mrb[0].mxu0
        %259 = vdwg.mxu0
        %vm260 = vcmask 261120
        %261 = vst.msk [vmem:[%s158] sm:$0xff] %vm260, %v252
        %262 = vst.msk [vmem:[%s158 + $0x8] sm:$0xff] %vm260, %v257
        %s263 = sand.u32 %s87, 1
        %s264 = scalar_lea.sflag [#allocation3], %s263
        %s265 = sand.u32 %s87, 1
        %s266 = smul.addr %s265, 16
        %s267 = scalar_lea.vmem [#allocation2], %s266
        // Predicated region
        $region29: #{tpu_custom_call.1} parent=27 // pred_check
          %p268 = pneg %p97
        $region30: #{tpu_custom_call.1} parent=27 // pred_check_branch
          %270 = sbr.rel (%p268) target = $region32
        $region31: #{tpu_custom_call.1} parent=27 // pred_region
          %s272 = ssub.s32 256, 256
          %273 = vsyncadd %s264, %s272
          %s274 = smul.addr %s20, 2
          %s275 = sadd.s32 %s21, %s274
          %s276 = smul.addr %s275, 128
          %s277 = scalar_lea.hbm %s2, %s276
          %s278 = sshll.u32 %s267, 4
          %s279 = int_to_ptr.vmem [resolvable:$true] %s278
          %284 = dma.vmem_to_hbm [thread:$0]  %s279, 256, %s277, %s264, 128, 128, 8
        $region32: #{tpu_custom_call.1} parent=27 // pred_fallthru
          _
      $region28: #{tpu_custom_call.1} parent=5 // pred_fallthru
        _
      %p285 = scmp.le.s32.totalorder 2, %s11
      // Predicated region
      $region33: #{tpu_custom_call.1} parent=5 // pred_check
        %p286 = pneg %p285
      $region34: #{tpu_custom_call.1} parent=5 // pred_check_branch
        %288 = sbr.rel (%p286) target = $region36
      $region35: #{tpu_custom_call.1} parent=5 // pred_region
        %s289 = ssub.s32 %s11, 2
        // Predicated region
        $region37: #{tpu_custom_call.1} parent=35 // pred_check
          %p290 = pneg %p103
        $region38: #{tpu_custom_call.1} parent=35 // pred_check_branch
          %292 = sbr.rel (%p290) target = $region40
        $region39: #{tpu_custom_call.1} parent=35 // pred_region
          %s293 = sand.u32 %s88, 1
          %s294 = scalar_lea.sflag [#allocation3], %s293
          %s295 = sand.u32 %s88, 1
          %s296 = smul.addr %s295, 16
          %s297 = scalar_lea.vmem [#allocation2], %s296
          %298 = dma.done %s294, 256
        $region40: #{tpu_custom_call.1} parent=35 // pred_fallthru
          _
      $region36: #{tpu_custom_call.1} parent=5 // pred_fallthru
        _
    $region6: #{tpu_custom_call.1} parent=1 // loop_footer
      %s15 = sadd.s32 1, %s11
    $region7: #{tpu_custom_call.1} parent=1 // loop_footer_branch
      %10 = sbr.rel target = $region3
    $region8: #{tpu_custom_call.1} parent=1 // loop_exit
      _
    %299 = vsyncpa [#allocation3], 1
    %s300 = scalar_lea.sflag [#allocation3], 1
    %301 = vsyncpa %s300, 1

</llo_original>
